<compile_context>
chip_gen: v5e
topology: v5e:2x2
jax: 0.10.0
libtpu: 0.0.40
codegen_flags: <defaults>
</compile_context>

<pallas_src>
import functools

import jax
import jax.numpy as jnp
from jax.experimental import pallas as pl
from jax.experimental.pallas import tpu as pltpu

GAMMA = 2
EPS = 1e-07  # defined in the module's __init__ but unused in forward (kept for parity)


def _focal_ce_partial_kernel(logits_ref, target_ref, psum_ref, *, n_valid):
    """Per-tile partial sum of numerically-stable cross entropy.

    logits_ref: (TILE_N, C)  float (any dtype, upcast to f32)
    target_ref: (TILE_N, 1)  int32 class indices
    psum_ref:   (1, 128)     f32, partial sum broadcast across lanes
    """
    i = pl.program_id(0)
    logits = logits_ref[...].astype(jnp.float32)           # (TILE_N, C)
    tgt = target_ref[...]                                   # (TILE_N, 1) int32
    tn, c = logits.shape

    # Mask rows past logical N (last tile may be a padded boundary block with
    # undefined contents). Zeroing keeps exp() finite and lets us mask ce later.
    row = jax.lax.broadcasted_iota(jnp.int32, (tn, 1), 0) + i * tn
    valid = row < n_valid                                    # (TILE_N, 1) bool
    logits = jnp.where(valid, logits, 0.0)

    # ce_i = logsumexp(logits_i) - logits_i[target_i]   (numerically stable)
    row_max = jnp.max(logits, axis=-1, keepdims=True)                      # (TILE_N, 1)
    lse = row_max + jnp.log(jnp.sum(jnp.exp(logits - row_max),
                                    axis=-1, keepdims=True))               # (TILE_N, 1)
    col = jax.lax.broadcasted_iota(jnp.int32, (tn, c), 1)                  # (TILE_N, C)
    # Select-based gather of the target-class logit (no one-hot multiply).
    correct_logit = jnp.sum(jnp.where(col == tgt, logits, 0.0),
                            axis=-1, keepdims=True)                        # (TILE_N, 1)
    ce = jnp.where(valid, lse - correct_logit, 0.0)                        # (TILE_N, 1)

    partial = jnp.sum(ce)                                    # scalar
    # Lane-dense store of the partial; wrapper reads lane 0.
    psum_ref[...] = jnp.full((1, 128), partial, dtype=jnp.float32)


def _pick_tile_n(n, c, itemsize):
    """Largest multiple-of-8 row tile whose double-buffered footprint fits budget."""
    # Per row of a tile: logits (c * itemsize) + target int32 lane-padded to 128.
    per_row = 2 * (c * itemsize + 128 * 4)       # x2 for double buffering
    budget = 16 * 1024 * 1024                    # conservative across v5e/v6e/v7x
    tile = budget // per_row
    tile = max(8, (tile // 8) * 8)
    tile = min(tile, 2048)                       # keep per-step latency reasonable
    n_pad = ((n + 7) // 8) * 8
    tile = min(tile, n_pad)
    return int(tile)


def focal_loss(logits, target, gamma=GAMMA):
    """logits: (N, C) float (f32 or bf16); target: (N,) int class indices.

    Returns scalar f32 focal loss (faithful to the PyTorch module: the focal
    modulation is applied to the *mean* cross entropy).
    """
    n, c = logits.shape
    target2d = target.astype(jnp.int32).reshape(n, 1)

    tile_n = _pick_tile_n(n, c, jnp.dtype(logits.dtype).itemsize)
    num_tiles = pl.cdiv(n, tile_n)

    kernel = functools.partial(_focal_ce_partial_kernel, n_valid=n)

    partials = pl.pallas_call(
        kernel,
        out_shape=jax.ShapeDtypeStruct((num_tiles, 128), jnp.float32),
        grid_spec=pl.GridSpec(
            grid=(num_tiles,),
            in_specs=[
                pl.BlockSpec((tile_n, c), lambda i: (i, 0)),   # logits rows
                pl.BlockSpec((tile_n, 1), lambda i: (i, 0)),   # targets
            ],
            out_specs=pl.BlockSpec((1, 128), lambda i: (i, 0)),
        ),
        compiler_params=pltpu.CompilerParams(
            dimension_semantics=("parallel",),
            vmem_limit_bytes=32 * 1024 * 1024,
        ),
    )(logits, target2d)

    # Tiny finalize in the wrapper (keeps the grid axis fully parallel).
    logp = jnp.sum(partials[:, 0]) / jnp.float32(n)          # mean cross entropy
    p = jnp.exp(-logp)
    one_minus_p = 1.0 - p
    if gamma == 2:
        mod = one_minus_p * one_minus_p                      # avoid pow lowering
    else:
        mod = one_minus_p ** gamma
    return mod * logp


def focal_loss_ref(logits, target, gamma=GAMMA):
    """Pure-JAX reference mirroring the PyTorch module."""
    logits = logits.astype(jnp.float32)
    logz = jax.nn.logsumexp(logits, axis=-1)
    correct = jnp.take_along_axis(logits, target[:, None].astype(jnp.int32),
                                  axis=-1)[:, 0]
    logp = jnp.mean(logz - correct)
    p = jnp.exp(-logp)
    return (1.0 - p) ** gamma * logp


if __name__ == "__main__":
    key = jax.random.PRNGKey(0)
    k1, k2 = jax.random.split(key)

    N, C = 8, 32  # small shapes consistent with CrossEntropyLoss(input=(N,C), target=(N,))
    logits = jax.random.normal(k1, (N, C), dtype=jnp.float32)
    target = jax.random.randint(k2, (N,), 0, C, dtype=jnp.int32)

    out = focal_loss(logits, target)
    jax.block_until_ready(out)

    ref = focal_loss_ref(logits, target)
    assert jnp.allclose(out, ref, rtol=1e-5, atol=1e-5), (out, ref)
    print("KERNEL_OK")
</pallas_src>

<mosaic_0001>
module attributes {stable_mosaic.version = 11 : i64} {
  func.func @_focal_ce_partial_kernel(%arg0: i32, %arg1: memref<8x32xf32, #tpu.memory_space<vmem>>, %arg2: memref<8x1xi32, #tpu.memory_space<vmem>>, %arg3: memref<1x128xf32, #tpu.memory_space<vmem>>) attributes {dimension_semantics = [#tpu.dimension_semantics<parallel>], iteration_bounds = array<i64: 1>, scalar_prefetch = 0 : i64, scratch_operands = 0 : i64, tpu.core_type = #tpu.core_type<tc>, window_params = [{transform_indices = @transform_0, window_bounds = array<i64: 8, 32>}, {transform_indices = @transform_1, window_bounds = array<i64: 8, 1>}, {transform_indices = @transform_2, window_bounds = array<i64: 1, 128>}]} {
    %c0 = arith.constant 0 : index
    %c0_0 = arith.constant 0 : index
    %0 = vector.load %arg1[%c0, %c0_0] : memref<8x32xf32, #tpu.memory_space<vmem>>, vector<8x32xf32>
    %c0_1 = arith.constant 0 : index
    %c0_2 = arith.constant 0 : index
    %1 = vector.load %arg2[%c0_1, %c0_2] : memref<8x1xi32, #tpu.memory_space<vmem>>, vector<8x1xi32>
    %2 = tpu.iota {dimensions = array<i32: 0>} : vector<8x1xi32>
    %c8_i32 = arith.constant 8 : i32
    %3 = arith.muli %arg0, %c8_i32 : i32
    %4 = vector.broadcast %3 : i32 to vector<8x1xi32>
    %5 = arith.addi %2, %4 : vector<8x1xi32>
    %c8_i32_3 = arith.constant 8 : i32
    %6 = vector.broadcast %c8_i32_3 : i32 to vector<8x1xi32>
    %7 = arith.cmpi slt, %5, %6 : vector<8x1xi32>
    %cst = arith.constant 0.000000e+00 : f32
    %8 = vector.shape_cast %7 : vector<8x1xi1> to vector<8x1xi1>
    %9 = vector.broadcast %8 : vector<8x1xi1> to vector<8x32xi1>
    %10 = vector.broadcast %cst : f32 to vector<8x32xf32>
    %11 = arith.select %9, %0, %10 : vector<8x32xi1>, vector<8x32xf32>
    %cst_4 = arith.constant dense<0xFF800000> : vector<8xf32>
    %12 = vector.multi_reduction <maximumf>, %11, %cst_4 [1] : vector<8x32xf32> to vector<8xf32>
    %13 = vector.shape_cast %12 : vector<8xf32> to vector<8x1xf32>
    %14 = vector.broadcast %13 : vector<8x1xf32> to vector<8x32xf32>
    %15 = arith.subf %11, %14 : vector<8x32xf32>
    %16 = math.exp %15 : vector<8x32xf32>
    %cst_5 = arith.constant dense<0.000000e+00> : vector<8xf32>
    %17 = vector.multi_reduction <add>, %16, %cst_5 [1] : vector<8x32xf32> to vector<8xf32>
    %18 = vector.shape_cast %17 : vector<8xf32> to vector<8x1xf32>
    %19 = math.log %18 : vector<8x1xf32>
    %20 = arith.addf %13, %19 : vector<8x1xf32>
    %21 = tpu.iota {dimensions = array<i32: 1>} : vector<8x32xi32>
    %22 = vector.broadcast %1 : vector<8x1xi32> to vector<8x32xi32>
    %23 = arith.cmpi eq, %21, %22 : vector<8x32xi32>
    %cst_6 = arith.constant 0.000000e+00 : f32
    %24 = vector.broadcast %cst_6 : f32 to vector<8x32xf32>
    %25 = arith.select %23, %11, %24 : vector<8x32xi1>, vector<8x32xf32>
    %cst_7 = arith.constant dense<0.000000e+00> : vector<8xf32>
    %26 = vector.multi_reduction <add>, %25, %cst_7 [1] : vector<8x32xf32> to vector<8xf32>
    %27 = vector.shape_cast %26 : vector<8xf32> to vector<8x1xf32>
    %28 = arith.subf %20, %27 : vector<8x1xf32>
    %cst_8 = arith.constant 0.000000e+00 : f32
    %29 = vector.broadcast %cst_8 : f32 to vector<8x1xf32>
    %30 = arith.select %7, %28, %29 : vector<8x1xi1>, vector<8x1xf32>
    %31 = vector.shape_cast %30 : vector<8x1xf32> to vector<1x8x1xf32>
    %cst_9 = arith.constant dense<0.000000e+00> : vector<1xf32>
    %32 = vector.multi_reduction <add>, %31, %cst_9 [1, 2] : vector<1x8x1xf32> to vector<1xf32>
    %33 = vector.shape_cast %32 : vector<1xf32> to vector<1x1x1xf32>
    %34 = vector.extract %33[0, 0, 0] : f32 from vector<1x1x1xf32>
    %35 = vector.broadcast %34 : f32 to vector<1x128xf32>
    %c0_10 = arith.constant 0 : index
    %c0_11 = arith.constant 0 : index
    %36 = vector.load %arg3[%c0_10, %c0_11] : memref<1x128xf32, #tpu.memory_space<vmem>>, vector<1x128xf32>
    tpu.vector_store %arg3[%c0_10, %c0_11], %35 {strides = array<i32>} : memref<1x128xf32, #tpu.memory_space<vmem>>, vector<1x128xf32>,
    return
  }
  func.func @transform_0(%arg0: i32) -> (i32, i32) {
    %c0_i32 = arith.constant 0 : i32
    %c0_i32_0 = arith.constant 0 : i32
    return %arg0, %c0_i32 : i32, i32
  }
  func.func @transform_1(%arg0: i32) -> (i32, i32) {
    %c0_i32 = arith.constant 0 : i32
    %c0_i32_0 = arith.constant 0 : i32
    return %arg0, %c0_i32 : i32, i32
  }
  func.func @transform_2(%arg0: i32) -> (i32, i32) {
    %c0_i32 = arith.constant 0 : i32
    %c0_i32_0 = arith.constant 0 : i32
    return %arg0, %c0_i32 : i32, i32
  }
}

</mosaic_0001>

<llo_original>
// kernel: tpu_custom_call.1
$region0: #{tpu_custom_call.1}
  #allocation0 [shape = 'u32[]', space=smem, size = 0x4, offset = 0x4, fixed_abs, tag = 'smem constant byte address 0x4 - core index']
  #allocation1 [shape = 'u32[72,128]{1,0:T(1,128)}', space=vmem, size = 0x9000, scoped, tag = 'internal scratch']
  %s0 = inlined_call_operand.vmem [shape: f32[8,32], index: 0, kind: input, shape index: {}]
  %s1 = inlined_call_operand.vmem [shape: s32[8,1], index: 1, kind: input, shape index: {}]
  %s2 = inlined_call_operand.hbm [shape: f32[1,128], index: 2, kind: output, shape index: {}]
  %s3 = sld [smem:[#allocation0]]
  $region18: #{tpu_custom_call.1} parent=0
    _
  %s5 = ssub.s32 1, %s3
  %s6 = scalar_select 0, %s5, %s3
  $region1: #{tpu_custom_call.1} parent=0
    #allocation2 [shape = 'u8[512]{0}', space=vmem, size = 0x400, scoped, tag = 'output window, operand 0, single buffered']
    #allocation3 [shape = 's32[1]{0}', space=sflag, size = 0x4, scoped, tag = 'scoped memory for tpu_custom_call.1']
    %7 = vsyncpa [#allocation3], 0
    // Predicated region
    $region2: #{tpu_custom_call.1} parent=1 // pred_check
      _
    $region3: #{tpu_custom_call.1} parent=1 // pred_check_branch
      %9 = sbr.rel (0) target = $region5
    $region4: #{tpu_custom_call.1} parent=1 // pred_region
      _
    $region5: #{tpu_custom_call.1} parent=1 // pred_fallthru
      _
    // Predicated region
    $region6: #{tpu_custom_call.1} parent=1 // pred_check
      _
    $region7: #{tpu_custom_call.1} parent=1 // pred_check_branch
      %11 = sbr.rel (0) target = $region9
    $region8: #{tpu_custom_call.1} parent=1 // pred_region
      _
    $region9: #{tpu_custom_call.1} parent=1 // pred_fallthru
      _
    %v12 = vld [vmem:[%s0] sm:$0xff]
    %v13 = vld [vmem:[%s1] sm:$0xff]
    %v14 = vlaneseq
    %v15 = vshrl.u32 %v14, 7
    %s16 = smul.u32 0, 8
    %v17 = vstv %s16
    %v18 = vadd.s32 %v15, %v17
    %vm19 = vcmp.lt.s32.totalorder %v18, 8
    %v20 = vsel %vm19, 1, 0
    %vm21 = vcmp.eq.s32.totalorder %v20, 1
    %v22 = vsel %vm21, %v12, 0.0
    %vm23 = vcmask 261120
    %v24 = vsel %vm23, %v22, -inf
    %25 = vmax.xlane.f32.xlu0 %v24
    %v26 = vpop.xlane.xlu0 %25
    %v27 = vsub.f32 %v22, %v26
    %v28 = vmul.f32 %v27, 1.442695
    %v29 = vpow.pop %v28
    %v30 = vsel %vm23, %v29, 0.0
    %31 = vadd.xlane.f32.xlu0 %v30
    %v32 = vpop.xlane.xlu0 %31
    %v33 = vlog2.pop %v32
    %v34 = vmul.f32 %v33, 0.6931472
    %v35 = vadd.f32 %v26, %v34
    %v36 = vlaneseq
    %v37 = vand.u32 %v36, 127
    %38 = vset.pattern.permute.xlu0 0
    %39 = vperm.xlu0 %38, %v13
    %v40 = vpop.permute.xlu0 %39
    %vm41 = vcmp.eq.s32.totalorder %v37, %v40
    %v42 = vsel %vm41, %v22, 0.0
    %v43 = vsel %vm23, %v42, 0.0
    %44 = vadd.xlane.f32.xlu0 %v43
    %v45 = vpop.xlane.xlu0 %44
    %v46 = vsub.f32 %v35, %v45
    %v47 = vsel %vm19, %v46, 0.0
    %vm48 = vcmask 7168
    %v49 = vsel %vm48, %v47, 0.0
    %50 = vadd.xlane.f32.xlu0 %v49
    %v51 = vpop.xlane.xlu0 %50
    %v52 = vrot.slane %v51, 4
    %v53 = vadd.f32 %v51, %v52
    %v54 = vrot.slane %v53, 2
    %v55 = vadd.f32 %v53, %v54
    %v56 = vrot.slane %v55, 1
    %v57 = vadd.f32 %v55, %v56
    %s58 = vtos %v57
    %v59 = vstv %s58
    %60 = vst [vmem:[#allocation2] sm:$0x1] %v59
    // Predicated region
    $region10: #{tpu_custom_call.1} parent=1 // pred_check
      _
    $region11: #{tpu_custom_call.1} parent=1 // pred_check_branch
      %62 = sbr.rel (0) target = $region13
    $region12: #{tpu_custom_call.1} parent=1 // pred_region
      %64 = vsyncadd [#allocation3], 0
      %s66 = sshll.u32 [#allocation2], 4
      %s67 = int_to_ptr.vmem [resolvable:$true] %s66
      %s68 = sshll.u32 %s2, 4
      %s69 = int_to_ptr.hbm [resolvable:$true] %s68
      %71 = dma.vmem_to_hbm [thread:$0]  %s67, 16, %s69, [#allocation3]
    $region13: #{tpu_custom_call.1} parent=1 // pred_fallthru
      _
    // Predicated region
    $region14: #{tpu_custom_call.1} parent=1 // pred_check
      _
    $region15: #{tpu_custom_call.1} parent=1 // pred_check_branch
      %73 = sbr.rel (0) target = $region17
    $region16: #{tpu_custom_call.1} parent=1 // pred_region
      %75 = dma.done [#allocation3], 16
    $region17: #{tpu_custom_call.1} parent=1 // pred_fallthru
      _
    %76 = vsyncpa [#allocation3], 1

</llo_original>
